<compile_context>
chip_gen: v5e
topology: v5e:2x2
jax: 0.10.0
libtpu: 0.0.40
codegen_flags: <defaults>
</compile_context>

<pallas_src>
import functools

import jax
import jax.numpy as jnp
from jax.experimental import pallas as pl
from jax.experimental.pallas import tpu as pltpu


def _round_up(n, m):
    return ((n + m - 1) // m) * m


# ---------------------------------------------------------------------------
# Kernel: whole MLP forward for one batch tile.  Intermediate activations stay
# as traced values (vregs / VMEM) and never round-trip through HBM.
# ---------------------------------------------------------------------------
def _fused_mlp_kernel(*refs, num_layers):
    """refs layout:
      refs[0]                      : x tile       [TB, Din_pad]   bf16
      refs[1 + 2*i], refs[2 + 2*i] : W_i, b_i     [Dpi, Dpo] bf16, [1, Dpo] f32
      refs[1 + 2*num_layers]       : output tile  [TB, Dout_pad]  out_dtype
    """
    x_ref = refs[0]
    o_ref = refs[1 + 2 * num_layers]

    cur = x_ref[...]  # bf16
    for i in range(num_layers):
        w = refs[1 + 2 * i][...]      # bf16 (Din_pad_i, Dout_pad_i)
        b = refs[2 + 2 * i][...]      # f32  (1, Dout_pad_i)
        # MXU: bf16 operands, f32 accumulation.  Bias add in f32 on the VPU.
        y = jnp.dot(cur, w, preferred_element_type=jnp.float32) + b
        if i < num_layers - 1:
            # Cast-then-ReLU: identical result to ReLU-then-cast, but the max
            # runs on packed bf16 vregs on v6e/v7x (half the VALU work).
            cur = jnp.maximum(y.astype(jnp.bfloat16), 0)
        else:
            o_ref[...] = y.astype(o_ref.dtype)


# ---------------------------------------------------------------------------
# One-time parameter preparation (hoisted out of the per-step forward).
# ---------------------------------------------------------------------------
def prepare_mlp_params(params):
    """Pad each (in, out) weight to lane-dense multiples of 128 and cast to
    bf16; pad each bias to (1, out_pad) f32.  Zero padding keeps the math
    exact.  Call ONCE and reuse the result for every forward."""
    dims = [params[0][0].shape[0]] + [w.shape[1] for w, _ in params]
    dims_pad = [_round_up(d, 128) for d in dims]
    prepared = []
    for li, (w, b) in enumerate(params):
        din, dout = w.shape
        dp_in, dp_out = dims_pad[li], dims_pad[li + 1]
        w_p = jnp.pad(w.astype(jnp.bfloat16),
                      ((0, dp_in - din), (0, dp_out - dout)))
        b_p = jnp.pad(b.reshape(1, dout).astype(jnp.float32),
                      ((0, 0), (0, dp_out - dout)))
        prepared.append((w_p, b_p))
    return prepared


def _resident_spec(block_shape):
    """BlockSpec for a grid-invariant (constant index_map) block: single-buffer
    it, since multi-buffering a never-changing block only wastes VMEM."""
    if hasattr(pl, "Buffered"):
        return pl.BlockSpec(block_shape, lambda i: (0, 0),
                            pipeline_mode=pl.Buffered(1))
    return pl.BlockSpec(block_shape, lambda i: (0, 0))


# ---------------------------------------------------------------------------
# Forward wrapper.
# ---------------------------------------------------------------------------
def mlp_forward_pallas(prepared_layers, x, *, out_features,
                       out_dtype=jnp.bfloat16):
    """Fused MLP forward: Linear -> ReLU -> Dropout(identity=eval) per hidden
    layer, final Linear.

    prepared_layers: output of prepare_mlp_params (padded bf16 W, f32 b).
    x: (batch, in_features) f32/bf16.
    """
    batch, din = x.shape
    num_layers = len(prepared_layers)
    dims_pad = ([prepared_layers[0][0].shape[0]]
                + [w.shape[1] for w, _ in prepared_layers])
    assert din <= dims_pad[0]

    # --- generation-aware VMEM budget -------------------------------------
    try:
        phys_vmem = int(getattr(pltpu.get_tpu_info(),
                                "vmem_capacity_bytes", 64 << 20))
    except Exception:  # pragma: no cover - conservative fallback
        phys_vmem = 64 << 20                      # v7x-sized, safe everywhere
    vmem_budget = int(phys_vmem * 0.75)           # headroom for Mosaic scratch

    out_itemsize = jnp.dtype(out_dtype).itemsize
    # Single-buffered weights/biases (see _resident_spec).
    weight_bytes = sum(w.size * w.dtype.itemsize + b.size * b.dtype.itemsize
                       for w, b in prepared_layers)
    dmax = max(dims_pad)
    # Per batch-row VMEM: double-buffered input & output tiles + f32 matmul
    # accumulator + bf16 intermediate activation (rough but conservative).
    row_bytes = (2 * dims_pad[0] * 2 + 2 * dims_pad[-1] * out_itemsize
                 + dmax * 4 + dmax * 2)

    # --- adaptive batch tile ----------------------------------------------
    tb_cap = (vmem_budget - weight_bytes - (4 << 20)) // max(row_bytes, 1)
    tb_cap = max(16, min(1024, (tb_cap // 16) * 16))
    if _round_up(batch, 16) <= tb_cap:
        tb = _round_up(batch, 16)                 # whole batch in one tile
    else:
        best_pad, tb = None, 16                   # minimize wasted padded rows
        for cand in range(tb_cap, 15, -16):
            pad = _round_up(batch, cand) - batch
            if best_pad is None or pad < best_pad:
                best_pad, tb = pad, cand
    b_pad = _round_up(batch, tb)
    grid = (b_pad // tb,)

    # Trivial grid -> "arbitrary" (avoids replicating every weight into both
    # v7x TensorCores for nothing); real batch tiling -> "parallel".
    semantics = ("arbitrary",) if grid[0] == 1 else ("parallel",)

    vmem_needed = weight_bytes + tb * row_bytes + (2 << 20)
    vmem_limit = int(min(vmem_budget, max(vmem_needed, 16 << 20)))

    # --- pad the activations (cheap, per-call; weights already prepared) ---
    x_p = jnp.pad(x.astype(jnp.bfloat16),
                  ((0, b_pad - batch), (0, dims_pad[0] - din)))

    inputs = [x_p]
    in_specs = [pl.BlockSpec((tb, dims_pad[0]), lambda i: (i, 0))]
    for w_p, b_p in prepared_layers:
        inputs += [w_p, b_p]
        in_specs += [_resident_spec(w_p.shape), _resident_spec(b_p.shape)]

    kernel = functools.partial(_fused_mlp_kernel, num_layers=num_layers)
    out_p = pl.pallas_call(
        kernel,
        out_shape=jax.ShapeDtypeStruct((b_pad, dims_pad[-1]), out_dtype),
        grid=grid,
        in_specs=in_specs,
        out_specs=pl.BlockSpec((tb, dims_pad[-1]), lambda i: (i, 0)),
        compiler_params=pltpu.CompilerParams(
            dimension_semantics=semantics,
            vmem_limit_bytes=vmem_limit,
        ),
    )(*inputs)

    return out_p[:batch, :out_features]


# ---------------------------------------------------------------------------
# Init matching PyTorch nn.Linear default: U(-1/sqrt(fan_in), 1/sqrt(fan_in)).
# ---------------------------------------------------------------------------
def init_mlp_params(key, layer_sizes):
    params = []
    for i in range(len(layer_sizes) - 1):
        fan_in, fan_out = layer_sizes[i], layer_sizes[i + 1]
        key, kw, kb = jax.random.split(key, 3)
        bound = 1.0 / (fan_in ** 0.5)
        # PyTorch weight shape is (out, in); store transposed (in, out).
        w = jax.random.uniform(kw, (fan_out, fan_in), jnp.float32, -bound, bound)
        b = jax.random.uniform(kb, (fan_out,), jnp.float32, -bound, bound)
        params.append((jnp.transpose(w), b))
    return params


if __name__ == "__main__":
    layer_sizes = [16, 32, 32, 8]   # input 16, two hidden layers of 32, output 8
    batch = 4

    key = jax.random.PRNGKey(0)
    key_x, key_p = jax.random.split(key)
    x = jax.random.normal(key_x, (batch, layer_sizes[0]), dtype=jnp.float32)
    params = init_mlp_params(key_p, layer_sizes)

    # One-time layout prep (pad + bf16 cast) -- hoisted out of the forward.
    prepared = prepare_mlp_params(params)

    forward = jax.jit(functools.partial(
        mlp_forward_pallas, out_features=layer_sizes[-1],
        out_dtype=jnp.bfloat16))
    out = jax.block_until_ready(forward(prepared, x))

    # Pure-JAX reference with matching precision (bf16 matmul operands, f32
    # accumulation, bf16 intermediates, bf16 output).
    ref = x
    for i, (w_t, b) in enumerate(params):
        ref = jnp.dot(ref.astype(jnp.bfloat16), w_t.astype(jnp.bfloat16),
                      preferred_element_type=jnp.float32) + b.reshape(1, -1)
        if i < len(params) - 1:
            ref = jnp.maximum(ref.astype(jnp.bfloat16), 0)
    ref = ref.astype(jnp.bfloat16).astype(jnp.float32)

    assert out.shape == (batch, layer_sizes[-1])
    err = float(jnp.max(jnp.abs(out.astype(jnp.float32) - ref)))
    assert err < 2e-2, f"max abs err = {err}"

    print("KERNEL_OK")
</pallas_src>

<mosaic_0001>
module attributes {stable_mosaic.version = 11 : i64} {
  func.func @_fused_mlp_kernel(%arg0: i32, %arg1: memref<16x128xbf16, #tpu.memory_space<vmem>>, %arg2: memref<128x128xbf16, #tpu.memory_space<vmem>>, %arg3: memref<1x128xf32, #tpu.memory_space<vmem>>, %arg4: memref<128x128xbf16, #tpu.memory_space<vmem>>, %arg5: memref<1x128xf32, #tpu.memory_space<vmem>>, %arg6: memref<128x128xbf16, #tpu.memory_space<vmem>>, %arg7: memref<1x128xf32, #tpu.memory_space<vmem>>, %arg8: memref<16x128xbf16, #tpu.memory_space<vmem>>) attributes {dimension_semantics = [#tpu.dimension_semantics<arbitrary>], iteration_bounds = array<i64: 1>, scalar_prefetch = 0 : i64, scratch_operands = 0 : i64, tpu.core_type = #tpu.core_type<tc>, window_params = [{transform_indices = @transform_0, window_bounds = array<i64: 16, 128>}, {pipeline_mode = #tpu.pipeline_mode<synchronous>, transform_indices = @transform_1, window_bounds = array<i64: 128, 128>}, {pipeline_mode = #tpu.pipeline_mode<synchronous>, transform_indices = @transform_2, window_bounds = array<i64: 1, 128>}, {pipeline_mode = #tpu.pipeline_mode<synchronous>, transform_indices = @transform_3, window_bounds = array<i64: 128, 128>}, {pipeline_mode = #tpu.pipeline_mode<synchronous>, transform_indices = @transform_4, window_bounds = array<i64: 1, 128>}, {pipeline_mode = #tpu.pipeline_mode<synchronous>, transform_indices = @transform_5, window_bounds = array<i64: 128, 128>}, {pipeline_mode = #tpu.pipeline_mode<synchronous>, transform_indices = @transform_6, window_bounds = array<i64: 1, 128>}, {transform_indices = @transform_7, window_bounds = array<i64: 16, 128>}]} {
    %c0 = arith.constant 0 : index
    %c0_0 = arith.constant 0 : index
    %0 = vector.load %arg1[%c0, %c0_0] : memref<16x128xbf16, #tpu.memory_space<vmem>>, vector<16x128xbf16>
    %c0_1 = arith.constant 0 : index
    %c0_2 = arith.constant 0 : index
    %1 = vector.load %arg2[%c0_1, %c0_2] : memref<128x128xbf16, #tpu.memory_space<vmem>>, vector<128x128xbf16>
    %c0_3 = arith.constant 0 : index
    %c0_4 = arith.constant 0 : index
    %2 = vector.load %arg3[%c0_3, %c0_4] : memref<1x128xf32, #tpu.memory_space<vmem>>, vector<1x128xf32>
    %cst = arith.constant dense<0.000000e+00> : vector<16x128xf32>
    %3 = tpu.matmul %0, %1, %cst {dimension_numbers = #tpu.dot_dimension_numbers<[1], [0], [0], [1], [0, 0, 1, 1], [], []>} : vector<16x128xbf16>, vector<128x128xbf16>, vector<16x128xf32> -> vector<16x128xf32>
    %4 = vector.broadcast %2 : vector<1x128xf32> to vector<16x128xf32>
    %5 = arith.addf %3, %4 : vector<16x128xf32>
    %6 = arith.truncf %5 : vector<16x128xf32> to vector<16x128xbf16>
    %cst_5 = arith.constant 0.000000e+00 : bf16
    %7 = vector.broadcast %cst_5 : bf16 to vector<16x128xbf16>
    %8 = arith.maximumf %6, %7 : vector<16x128xbf16>
    %c0_6 = arith.constant 0 : index
    %c0_7 = arith.constant 0 : index
    %9 = vector.load %arg4[%c0_6, %c0_7] : memref<128x128xbf16, #tpu.memory_space<vmem>>, vector<128x128xbf16>
    %c0_8 = arith.constant 0 : index
    %c0_9 = arith.constant 0 : index
    %10 = vector.load %arg5[%c0_8, %c0_9] : memref<1x128xf32, #tpu.memory_space<vmem>>, vector<1x128xf32>
    %cst_10 = arith.constant dense<0.000000e+00> : vector<16x128xf32>
    %11 = tpu.matmul %8, %9, %cst_10 {dimension_numbers = #tpu.dot_dimension_numbers<[1], [0], [0], [1], [0, 0, 1, 1], [], []>} : vector<16x128xbf16>, vector<128x128xbf16>, vector<16x128xf32> -> vector<16x128xf32>
    %12 = vector.broadcast %10 : vector<1x128xf32> to vector<16x128xf32>
    %13 = arith.addf %11, %12 : vector<16x128xf32>
    %14 = arith.truncf %13 : vector<16x128xf32> to vector<16x128xbf16>
    %cst_11 = arith.constant 0.000000e+00 : bf16
    %15 = vector.broadcast %cst_11 : bf16 to vector<16x128xbf16>
    %16 = arith.maximumf %14, %15 : vector<16x128xbf16>
    %c0_12 = arith.constant 0 : index
    %c0_13 = arith.constant 0 : index
    %17 = vector.load %arg6[%c0_12, %c0_13] : memref<128x128xbf16, #tpu.memory_space<vmem>>, vector<128x128xbf16>
    %c0_14 = arith.constant 0 : index
    %c0_15 = arith.constant 0 : index
    %18 = vector.load %arg7[%c0_14, %c0_15] : memref<1x128xf32, #tpu.memory_space<vmem>>, vector<1x128xf32>
    %cst_16 = arith.constant dense<0.000000e+00> : vector<16x128xf32>
    %19 = tpu.matmul %16, %17, %cst_16 {dimension_numbers = #tpu.dot_dimension_numbers<[1], [0], [0], [1], [0, 0, 1, 1], [], []>} : vector<16x128xbf16>, vector<128x128xbf16>, vector<16x128xf32> -> vector<16x128xf32>
    %20 = vector.broadcast %18 : vector<1x128xf32> to vector<16x128xf32>
    %21 = arith.addf %19, %20 : vector<16x128xf32>
    %22 = arith.truncf %21 : vector<16x128xf32> to vector<16x128xbf16>
    %c0_17 = arith.constant 0 : index
    %c0_18 = arith.constant 0 : index
    %23 = vector.load %arg8[%c0_17, %c0_18] : memref<16x128xbf16, #tpu.memory_space<vmem>>, vector<16x128xbf16>
    tpu.vector_store %arg8[%c0_17, %c0_18], %22 {strides = array<i32>} : memref<16x128xbf16, #tpu.memory_space<vmem>>, vector<16x128xbf16>,
    return
  }
  func.func @transform_0(%arg0: i32) -> (i32, i32) {
    %c0_i32 = arith.constant 0 : i32
    %c0_i32_0 = arith.constant 0 : i32
    return %arg0, %c0_i32 : i32, i32
  }
  func.func @transform_1(%arg0: i32) -> (i32, i32) {
    %c0_i32 = arith.constant 0 : i32
    %c0_i32_0 = arith.constant 0 : i32
    %c0_i32_1 = arith.constant 0 : i32
    return %c0_i32, %c0_i32_0 : i32, i32
  }
  func.func @transform_2(%arg0: i32) -> (i32, i32) {
    %c0_i32 = arith.constant 0 : i32
    %c0_i32_0 = arith.constant 0 : i32
    %c0_i32_1 = arith.constant 0 : i32
    return %c0_i32, %c0_i32_0 : i32, i32
  }
  func.func @transform_3(%arg0: i32) -> (i32, i32) {
    %c0_i32 = arith.constant 0 : i32
    %c0_i32_0 = arith.constant 0 : i32
    %c0_i32_1 = arith.constant 0 : i32
    return %c0_i32, %c0_i32_0 : i32, i32
  }
  func.func @transform_4(%arg0: i32) -> (i32, i32) {
    %c0_i32 = arith.constant 0 : i32
    %c0_i32_0 = arith.constant 0 : i32
    %c0_i32_1 = arith.constant 0 : i32
    return %c0_i32, %c0_i32_0 : i32, i32
  }
  func.func @transform_5(%arg0: i32) -> (i32, i32) {
    %c0_i32 = arith.constant 0 : i32
    %c0_i32_0 = arith.constant 0 : i32
    %c0_i32_1 = arith.constant 0 : i32
    return %c0_i32, %c0_i32_0 : i32, i32
  }
  func.func @transform_6(%arg0: i32) -> (i32, i32) {
    %c0_i32 = arith.constant 0 : i32
    %c0_i32_0 = arith.constant 0 : i32
    %c0_i32_1 = arith.constant 0 : i32
    return %c0_i32, %c0_i32_0 : i32, i32
  }
  func.func @transform_7(%arg0: i32) -> (i32, i32) {
    %c0_i32 = arith.constant 0 : i32
    %c0_i32_0 = arith.constant 0 : i32
    return %arg0, %c0_i32 : i32, i32
  }
}

</mosaic_0001>

<llo_original>
// kernel: mlp_forward_pallas.1
$region0: #{mlp_forward_pallas.1}
  #allocation0 [shape = 'u32[]', space=smem, size = 0x4, offset = 0x4, fixed_abs, tag = 'smem constant byte address 0x4 - core index']
  #allocation1 [shape = 'u32[72,128]{1,0:T(1,128)}', space=vmem, size = 0x9000, scoped, tag = 'internal scratch']
  %s0 = inlined_call_operand.vmem [shape: bf16[16,128], index: 0, kind: input, shape index: {}]
  %s1 = inlined_call_operand.hbm [shape: bf16[128,128], index: 1, kind: input, shape index: {}]
  %s2 = inlined_call_operand.vmem [shape: f32[1,128], index: 2, kind: input, shape index: {}]
  %s3 = inlined_call_operand.hbm [shape: bf16[128,128], index: 3, kind: input, shape index: {}]
  %s4 = inlined_call_operand.vmem [shape: f32[1,128], index: 4, kind: input, shape index: {}]
  %s5 = inlined_call_operand.hbm [shape: bf16[128,128], index: 5, kind: input, shape index: {}]
  %s6 = inlined_call_operand.vmem [shape: f32[1,128], index: 6, kind: input, shape index: {}]
  %s7 = inlined_call_operand.vmem [shape: bf16[16,128], index: 7, kind: output, shape index: {}]
  %s8 = sld [smem:[#allocation0]]
  $region50: #{mlp_forward_pallas.1} parent=0
    _
  %s10 = ssub.s32 1, %s8
  %s11 = scalar_select 0, %s10, %s8
  $region1: #{mlp_forward_pallas.1} parent=0
    #allocation2 [shape = 'u8[32768]{0}', space=vmem, size = 0x8000, scoped, tag = 'input window, operand 1, single buffered']
    #allocation3 [shape = 's32[1]{0}', space=sflag, size = 0x4, scoped, tag = 'scoped memory for mlp_forward_pallas.1']
    #allocation4 [shape = 'u8[32768]{0}', space=vmem, size = 0x8000, scoped, tag = 'input window, operand 3, single buffered']
    #allocation5 [shape = 's32[1]{0}', space=sflag, size = 0x4, scoped, tag = 'scoped memory for mlp_forward_pallas.1']
    #allocation6 [shape = 'u8[32768]{0}', space=vmem, size = 0x8000, scoped, tag = 'input window, operand 5, single buffered']
    %12 = vsyncpa [#allocation3], 0
    %13 = vsyncpa [#allocation5], 0
    // Predicated region
    $region2: #{mlp_forward_pallas.1} parent=1 // pred_check
      _
    $region3: #{mlp_forward_pallas.1} parent=1 // pred_check_branch
      %15 = sbr.rel (0) target = $region5
    $region4: #{mlp_forward_pallas.1} parent=1 // pred_region
      _
    $region5: #{mlp_forward_pallas.1} parent=1 // pred_fallthru
      _
    // Predicated region
    $region6: #{mlp_forward_pallas.1} parent=1 // pred_check
      _
    $region7: #{mlp_forward_pallas.1} parent=1 // pred_check_branch
      %17 = sbr.rel (0) target = $region9
    $region8: #{mlp_forward_pallas.1} parent=1 // pred_region
      %19 = vsyncadd [#allocation3], 0
      %s20 = sshll.u32 %s1, 4
      %s21 = int_to_ptr.hbm [resolvable:$true] %s20
      %s22 = sshll.u32 [#allocation2], 4
      %s23 = int_to_ptr.vmem [resolvable:$true] %s22
      %28 = dma.hbm_to_vmem [thread:$0]  %s21, 1024, %s23, [#allocation3], 64, 64, 4
    $region9: #{mlp_forward_pallas.1} parent=1 // pred_fallthru
      _
    // Predicated region
    $region10: #{mlp_forward_pallas.1} parent=1 // pred_check
      _
    $region11: #{mlp_forward_pallas.1} parent=1 // pred_check_branch
      %30 = sbr.rel (0) target = $region13
    $region12: #{mlp_forward_pallas.1} parent=1 // pred_region
      _
    $region13: #{mlp_forward_pallas.1} parent=1 // pred_fallthru
      _
    // Predicated region
    $region14: #{mlp_forward_pallas.1} parent=1 // pred_check
      _
    $region15: #{mlp_forward_pallas.1} parent=1 // pred_check_branch
      %32 = sbr.rel (0) target = $region17
    $region16: #{mlp_forward_pallas.1} parent=1 // pred_region
      %34 = vsyncadd [#allocation5], 0
      %s35 = sshll.u32 %s3, 4
      %s36 = int_to_ptr.hbm [resolvable:$true] %s35
      %s37 = sshll.u32 [#allocation4], 4
      %s38 = int_to_ptr.vmem [resolvable:$true] %s37
      %43 = dma.hbm_to_vmem [thread:$0]  %s36, 1024, %s38, [#allocation5], 64, 64, 4
    $region17: #{mlp_forward_pallas.1} parent=1 // pred_fallthru
      _
    // Predicated region
    $region18: #{mlp_forward_pallas.1} parent=1 // pred_check
      _
    $region19: #{mlp_forward_pallas.1} parent=1 // pred_check_branch
      %45 = sbr.rel (0) target = $region21
    $region20: #{mlp_forward_pallas.1} parent=1 // pred_region
      _
    $region21: #{mlp_forward_pallas.1} parent=1 // pred_fallthru
      _
    // Predicated region
    $region22: #{mlp_forward_pallas.1} parent=1 // pred_check
      _
    $region23: #{mlp_forward_pallas.1} parent=1 // pred_check_branch
      %47 = sbr.rel (0) target = $region25
    $region24: #{mlp_forward_pallas.1} parent=1 // pred_region
      %49 = vsyncadd [#allocation5], 0
      %s50 = sshll.u32 %s5, 4
      %s51 = int_to_ptr.hbm [resolvable:$true] %s50
      %s52 = sshll.u32 [#allocation6], 4
      %s53 = int_to_ptr.vmem [resolvable:$true] %s52
      %58 = dma.hbm_to_vmem [thread:$0]  %s51, 1024, %s53, [#allocation5], 64, 64, 4
    $region25: #{mlp_forward_pallas.1} parent=1 // pred_fallthru
      _
    // Predicated region
    $region26: #{mlp_forward_pallas.1} parent=1 // pred_check
      _
    $region27: #{mlp_forward_pallas.1} parent=1 // pred_check_branch
      %60 = sbr.rel (0) target = $region29
    $region28: #{mlp_forward_pallas.1} parent=1 // pred_region
      _
    $region29: #{mlp_forward_pallas.1} parent=1 // pred_fallthru
      _
    // Predicated region
    $region30: #{mlp_forward_pallas.1} parent=1 // pred_check
      _
    $region31: #{mlp_forward_pallas.1} parent=1 // pred_check_branch
      %62 = sbr.rel (0) target = $region33
    $region32: #{mlp_forward_pallas.1} parent=1 // pred_region
      %64 = dma.done [#allocation3], 1024
    $region33: #{mlp_forward_pallas.1} parent=1 // pred_fallthru
      _
    // Predicated region
    $region34: #{mlp_forward_pallas.1} parent=1 // pred_check
      _
    $region35: #{mlp_forward_pallas.1} parent=1 // pred_check_branch
      %66 = sbr.rel (0) target = $region37
    $region36: #{mlp_forward_pallas.1} parent=1 // pred_region
      %68 = dma.done [#allocation5], 1024
    $region37: #{mlp_forward_pallas.1} parent=1 // pred_fallthru
      _
    // Predicated region
    $region38: #{mlp_forward_pallas.1} parent=1 // pred_check
      _
    $region39: #{mlp_forward_pallas.1} parent=1 // pred_check_branch
      %70 = sbr.rel (0) target = $region41
    $region40: #{mlp_forward_pallas.1} parent=1 // pred_region
      %72 = dma.done [#allocation5], 1024
    $region41: #{mlp_forward_pallas.1} parent=1 // pred_fallthru
      _
    %v73 = vld [vmem:[%s0] sm:$0xf]
    %v74 = vld [vmem:[%s0 + $0x4] sm:$0xf]
    %v75 = vld [vmem:[#allocation2] sm:$0xf]
    %v76 = vld [vmem:[#allocation2 + $0x4] sm:$0xf]
    %v77 = vld [vmem:[#allocation2 + $0x8] sm:$0xf]
    %v78 = vld [vmem:[#allocation2 + $0xc] sm:$0xf]
    %v79 = vld [vmem:[#allocation2 + $0x10] sm:$0xf]
    %v80 = vld [vmem:[#allocation2 + $0x14] sm:$0xf]
    %v81 = vld [vmem:[#allocation2 + $0x18] sm:$0xf]
    %v82 = vld [vmem:[#allocation2 + $0x1c] sm:$0xf]
    %v83 = vld [vmem:[#allocation2 + $0x20] sm:$0xf]
    %v84 = vld [vmem:[#allocation2 + $0x24] sm:$0xf]
    %v85 = vld [vmem:[#allocation2 + $0x28] sm:$0xf]
    %v86 = vld [vmem:[#allocation2 + $0x2c] sm:$0xf]
    %v87 = vld [vmem:[#allocation2 + $0x30] sm:$0xf]
    %v88 = vld [vmem:[#allocation2 + $0x34] sm:$0xf]
    %v89 = vld [vmem:[#allocation2 + $0x38] sm:$0xf]
    %v90 = vld [vmem:[#allocation2 + $0x3c] sm:$0xf]
    %v91 = vld [vmem:[%s2] sm:$0x1]
    %v93 = vperm.slane %v91, 0
    %v97 = vunpack.c.l.b16 %v73
    %v98 = vunpack.c.l.b16 %v74
    %v99 = vpack.c.b16 %v98, %v97
    %v117 = vunpack.c.l.b16 %v75
    %v118 = vunpack.c.l.b16 %v76
    %v119 = vunpack.c.l.b16 %v77
    %v120 = vunpack.c.l.b16 %v78
    %v121 = vunpack.c.l.b16 %v79
    %v122 = vunpack.c.l.b16 %v80
    %v123 = vunpack.c.l.b16 %v81
    %v124 = vunpack.c.l.b16 %v82
    %v125 = vunpack.c.l.b16 %v83
    %v126 = vunpack.c.l.b16 %v84
    %v127 = vunpack.c.l.b16 %v85
    %v128 = vunpack.c.l.b16 %v86
    %v129 = vunpack.c.l.b16 %v87
    %v130 = vunpack.c.l.b16 %v88
    %v131 = vunpack.c.l.b16 %v89
    %v132 = vunpack.c.l.b16 %v90
    %v133 = vpack.c.b16 %v118, %v117
    %v134 = vpack.c.b16 %v120, %v119
    %v135 = vpack.c.b16 %v122, %v121
    %v136 = vpack.c.b16 %v124, %v123
    %v137 = vpack.c.b16 %v126, %v125
    %v138 = vpack.c.b16 %v128, %v127
    %v139 = vpack.c.b16 %v130, %v129
    %v140 = vpack.c.b16 %v132, %v131
    %149 = vmatpush.bf16.msra.mxu0 %v140
    %150 = vmatpush.bf16.msra.mxu0 %v139
    %151 = vmatpush.bf16.msra.mxu0 %v138
    %152 = vmatpush.bf16.msra.mxu0 %v137
    %153 = vmatpush.bf16.msra.mxu0 %v136
    %154 = vmatpush.bf16.msra.mxu0 %v135
    %155 = vmatpush.bf16.msra.mxu0 %v134
    %156 = vmatpush.bf16.msra.mxu0 %v133
    %157 = vmatmul.bf16.gmra.mxu0 %v99
    %v158 = vpop.f32.mrf.mxu0
    %v159 = vadd.f32 %v93, %v158
    %v160 = vpop.f32.mrf.mxu0
    %v161 = vadd.f32 %v93, %v160
    %162 = vdwg.mxu0
    %v163 = vpack.c.bf16 %v159, %v159
    %v164 = vpack.c.bf16 %v161, %v161
    %v165 = vunpack.c.l.bf16 %v163
    %v166 = vunpack.c.l.bf16 %v164
    %v167 = vmax.f32 %v165, 0.0
    %v168 = vmax.f32 %v166, 0.0
    %v169 = vpack.c.bf16 %v168, %v167
    %v170 = vld [vmem:[#allocation4] sm:$0xf]
    %v171 = vld [vmem:[#allocation4 + $0x4] sm:$0xf]
    %v172 = vld [vmem:[#allocation4 + $0x8] sm:$0xf]
    %v173 = vld [vmem:[#allocation4 + $0xc] sm:$0xf]
    %v174 = vld [vmem:[#allocation4 + $0x10] sm:$0xf]
    %v175 = vld [vmem:[#allocation4 + $0x14] sm:$0xf]
    %v176 = vld [vmem:[#allocation4 + $0x18] sm:$0xf]
    %v177 = vld [vmem:[#allocation4 + $0x1c] sm:$0xf]
    %v178 = vld [vmem:[#allocation4 + $0x20] sm:$0xf]
    %v179 = vld [vmem:[#allocation4 + $0x24] sm:$0xf]
    %v180 = vld [vmem:[#allocation4 + $0x28] sm:$0xf]
    %v181 = vld [vmem:[#allocation4 + $0x2c] sm:$0xf]
    %v182 = vld [vmem:[#allocation4 + $0x30] sm:$0xf]
    %v183 = vld [vmem:[#allocation4 + $0x34] sm:$0xf]
    %v184 = vld [vmem:[#allocation4 + $0x38] sm:$0xf]
    %v185 = vld [vmem:[#allocation4 + $0x3c] sm:$0xf]
    %v186 = vld [vmem:[%s4] sm:$0x1]
    %v188 = vperm.slane %v186, 0
    %v206 = vunpack.c.l.b16 %v170
    %v207 = vunpack.c.l.b16 %v171
    %v208 = vunpack.c.l.b16 %v172
    %v209 = vunpack.c.l.b16 %v173
    %v210 = vunpack.c.l.b16 %v174
    %v211 = vunpack.c.l.b16 %v175
    %v212 = vunpack.c.l.b16 %v176
    %v213 = vunpack.c.l.b16 %v177
    %v214 = vunpack.c.l.b16 %v178
    %v215 = vunpack.c.l.b16 %v179
    %v216 = vunpack.c.l.b16 %v180
    %v217 = vunpack.c.l.b16 %v181
    %v218 = vunpack.c.l.b16 %v182
    %v219 = vunpack.c.l.b16 %v183
    %v220 = vunpack.c.l.b16 %v184
    %v221 = vunpack.c.l.b16 %v185
    %v222 = vpack.c.b16 %v207, %v206
    %v223 = vpack.c.b16 %v209, %v208
    %v224 = vpack.c.b16 %v211, %v210
    %v225 = vpack.c.b16 %v213, %v212
    %v226 = vpack.c.b16 %v215, %v214
    %v227 = vpack.c.b16 %v217, %v216
    %v228 = vpack.c.b16 %v219, %v218
    %v229 = vpack.c.b16 %v221, %v220
    %238 = vmatpush.bf16.msra.mxu0 %v229
    %239 = vmatpush.bf16.msra.mxu0 %v228
    %240 = vmatpush.bf16.msra.mxu0 %v227
    %241 = vmatpush.bf16.msra.mxu0 %v226
    %242 = vmatpush.bf16.msra.mxu0 %v225
    %243 = vmatpush.bf16.msra.mxu0 %v224
    %244 = vmatpush.bf16.msra.mxu0 %v223
    %245 = vmatpush.bf16.msra.mxu0 %v222
    %246 = vmatmul.bf16.gmra.mxu0 %v169
    %v247 = vpop.f32.mrf.mxu0
    %v248 = vadd.f32 %v188, %v247
    %v249 = vpop.f32.mrf.mxu0
    %v250 = vadd.f32 %v188, %v249
    %251 = vdwg.mxu0
    %v252 = vpack.c.bf16 %v248, %v248
    %v253 = vpack.c.bf16 %v250, %v250
    %v254 = vunpack.c.l.bf16 %v252
    %v255 = vunpack.c.l.bf16 %v253
    %v256 = vmax.f32 %v254, 0.0
    %v257 = vmax.f32 %v255, 0.0
    %v258 = vpack.c.bf16 %v257, %v256
    %v259 = vld [vmem:[#allocation6] sm:$0xf]
    %v260 = vld [vmem:[#allocation6 + $0x4] sm:$0xf]
    %v261 = vld [vmem:[#allocation6 + $0x8] sm:$0xf]
    %v262 = vld [vmem:[#allocation6 + $0xc] sm:$0xf]
    %v263 = vld [vmem:[#allocation6 + $0x10] sm:$0xf]
    %v264 = vld [vmem:[#allocation6 + $0x14] sm:$0xf]
    %v265 = vld [vmem:[#allocation6 + $0x18] sm:$0xf]
    %v266 = vld [vmem:[#allocation6 + $0x1c] sm:$0xf]
    %v267 = vld [vmem:[#allocation6 + $0x20] sm:$0xf]
    %v268 = vld [vmem:[#allocation6 + $0x24] sm:$0xf]
    %v269 = vld [vmem:[#allocation6 + $0x28] sm:$0xf]
    %v270 = vld [vmem:[#allocation6 + $0x2c] sm:$0xf]
    %v271 = vld [vmem:[#allocation6 + $0x30] sm:$0xf]
    %v272 = vld [vmem:[#allocation6 + $0x34] sm:$0xf]
    %v273 = vld [vmem:[#allocation6 + $0x38] sm:$0xf]
    %v274 = vld [vmem:[#allocation6 + $0x3c] sm:$0xf]
    %v275 = vld [vmem:[%s6] sm:$0x1]
    %v277 = vperm.slane %v275, 0
    %v295 = vunpack.c.l.b16 %v259
    %v296 = vunpack.c.l.b16 %v260
    %v297 = vunpack.c.l.b16 %v261
    %v298 = vunpack.c.l.b16 %v262
    %v299 = vunpack.c.l.b16 %v263
    %v300 = vunpack.c.l.b16 %v264
    %v301 = vunpack.c.l.b16 %v265
    %v302 = vunpack.c.l.b16 %v266
    %v303 = vunpack.c.l.b16 %v267
    %v304 = vunpack.c.l.b16 %v268
    %v305 = vunpack.c.l.b16 %v269
    %v306 = vunpack.c.l.b16 %v270
    %v307 = vunpack.c.l.b16 %v271
    %v308 = vunpack.c.l.b16 %v272
    %v309 = vunpack.c.l.b16 %v273
    %v310 = vunpack.c.l.b16 %v274
    %v311 = vpack.c.b16 %v296, %v295
    %v312 = vpack.c.b16 %v298, %v297
    %v313 = vpack.c.b16 %v300, %v299
    %v314 = vpack.c.b16 %v302, %v301
    %v315 = vpack.c.b16 %v304, %v303
    %v316 = vpack.c.b16 %v306, %v305
    %v317 = vpack.c.b16 %v308, %v307
    %v318 = vpack.c.b16 %v310, %v309
    %327 = vmatpush.bf16.msra.mxu0 %v318
    %328 = vmatpush.bf16.msra.mxu0 %v317
    %329 = vmatpush.bf16.msra.mxu0 %v316
    %330 = vmatpush.bf16.msra.mxu0 %v315
    %331 = vmatpush.bf16.msra.mxu0 %v314
    %332 = vmatpush.bf16.msra.mxu0 %v313
    %333 = vmatpush.bf16.msra.mxu0 %v312
    %334 = vmatpush.bf16.msra.mxu0 %v311
    %335 = vmatmul.bf16.gmra.mxu0 %v258
    %v336 = vpop.f32.mrf.mxu0
    %v337 = vadd.f32 %v277, %v336
    %v338 = vpop.f32.mrf.mxu0
    %v339 = vadd.f32 %v277, %v338
    %340 = vdwg.mxu0
    %v341 = vpack.c.bf16 %v337, %v337
    %v342 = vpack.c.bf16 %v339, %v339
    %343 = vst [vmem:[%s7] sm:$0xf] %v341
    %344 = vst [vmem:[%s7 + $0x4] sm:$0xf] %v342
    // Predicated region
    $region42: #{mlp_forward_pallas.1} parent=1 // pred_check
      _
    $region43: #{mlp_forward_pallas.1} parent=1 // pred_check_branch
      %346 = sbr.rel (0) target = $region45
    $region44: #{mlp_forward_pallas.1} parent=1 // pred_region
      _
    $region45: #{mlp_forward_pallas.1} parent=1 // pred_fallthru
      _
    // Predicated region
    $region46: #{mlp_forward_pallas.1} parent=1 // pred_check
      _
    $region47: #{mlp_forward_pallas.1} parent=1 // pred_check_branch
      %348 = sbr.rel (0) target = $region49
    $region48: #{mlp_forward_pallas.1} parent=1 // pred_region
      _
    $region49: #{mlp_forward_pallas.1} parent=1 // pred_fallthru
      _
    %349 = vsyncpa [#allocation3], 1
    %350 = vsyncpa [#allocation5], 1

</llo_original>
